<compile_context>
chip_gen: v7x
topology: tpu7x:2x2x1
jax: 0.10.0
libtpu: 0.0.40
codegen_flags: <defaults>
</compile_context>

<pallas_src>
import math

import jax
import jax.numpy as jnp
from jax.experimental import pallas as pl
from jax.experimental.pallas import tpu as pltpu


def _input_scale_kernel(x_ref, c_ref, s_ref, o_ref):
    # x_ref: (tm, L); c_ref / s_ref: (1, L) broadcast over rows (pure VPU).
    o_ref[...] = ((x_ref[...] - c_ref[...]) * s_ref[...]).astype(o_ref.dtype)


def input_scale_net(x, scales, centers, *, target_block_bytes=2 << 20):
    """Pallas implementation of InputScaleNet.forward.

    x:       (..., D) array
    scales:  (D,) array
    centers: (D,) array
    returns  (..., D) array = (x - centers) * scales
    """
    orig_shape = x.shape
    orig_dtype = x.dtype
    D = int(orig_shape[-1])
    total = int(x.size)

    # Keep parameter dtype equal to x dtype so the elementwise math and the
    # final cast are well-defined for bf16 inputs too.
    scales = scales.astype(orig_dtype)
    centers = centers.astype(orig_dtype)

    # --- lane-dense layout ------------------------------------------------
    # L must be a multiple of 128 (lane axis) and of D (so a tiled
    # scale/center row lines up with the flattened feature pattern).
    base = math.lcm(D, 128)
    L = base * max(1, -(-512 // base))  # at least 512 lanes

    # Rows per tile: ~target_block_bytes per buffer, multiple of 8 sublanes.
    bpe = jnp.dtype(orig_dtype).itemsize
    tm = max(8, (target_block_bytes // (L * bpe)) // 8 * 8)

    # Pad the flattened data so it reshapes cleanly to (R, L) with R % 8 == 0.
    pad_unit = 8 * L
    padded = -(-total // pad_unit) * pad_unit
    x_flat = jnp.ravel(x)
    if padded != total:
        x_flat = jnp.concatenate(
            [x_flat, jnp.zeros((padded - total,), dtype=orig_dtype)]
        )
    R = padded // L
    x2d = x_flat.reshape(R, L)

    tm = min(tm, R)
    # Prefer a grid of length >= 2 so the "parallel" axis can be sharded
    # across both TensorCores on v7x (no effect on single-TC parts).
    if R > 8 and pl.cdiv(R, tm) < 2:
        half = (R + 1) // 2
        tm = ((half + 7) // 8) * 8

    # Pre-broadcast parameters to one lane-dense row each; constant index_map
    # keeps them resident in VMEM (single DMA for the whole call).
    scales_row = jnp.tile(scales, L // D).reshape(1, L)
    centers_row = jnp.tile(centers, L // D).reshape(1, L)

    grid = (pl.cdiv(R, tm),)

    out2d = pl.pallas_call(
        _input_scale_kernel,
        out_shape=jax.ShapeDtypeStruct((R, L), orig_dtype),
        grid_spec=pltpu.PrefetchScalarGridSpec(
            num_scalar_prefetch=0,
            grid=grid,
            in_specs=[
                pl.BlockSpec((tm, L), lambda i: (i, 0)),  # streaming x tile
                pl.BlockSpec((1, L), lambda i: (0, 0)),   # centers (resident)
                pl.BlockSpec((1, L), lambda i: (0, 0)),   # scales  (resident)
            ],
            out_specs=pl.BlockSpec((tm, L), lambda i: (i, 0)),
        ),
        compiler_params=pltpu.CompilerParams(
            dimension_semantics=("parallel",),
        ),
    )(x2d, centers_row, scales_row)

    return out2d.reshape(-1)[:total].reshape(orig_shape)


if __name__ == "__main__":
    key = jax.random.PRNGKey(0)

    # Small shapes consistent with the module: 16 samples of 2-D (x, y)
    # coordinate inputs for f(x, y) = A sin(Bx) sin(Cy).
    N, D = 16, 2
    x = jax.random.normal(key, (N, D), dtype=jnp.float32)

    # Deterministic "parameters" (the module stores these from __init__ args).
    scales = jnp.array([2.0, 3.0], dtype=jnp.float32)
    centers = jnp.array([0.5, -0.5], dtype=jnp.float32)

    out = input_scale_net(x, scales, centers)
    out = jax.block_until_ready(out)

    # Reference check (plain JAX mirror of the PyTorch forward).
    ref = (x - centers[None, :]) * scales[None, :]
    assert out.shape == ref.shape, "shape mismatch vs reference"
    assert jnp.allclose(out, ref, atol=1e-6, rtol=1e-6), "mismatch vs reference"

    # Also exercise a ragged / larger shape to cover the padded, multi-tile path.
    x_big = jax.random.normal(jax.random.PRNGKey(1), (1000, D), dtype=jnp.float32)
    out_big = jax.block_until_ready(input_scale_net(x_big, scales, centers))
    ref_big = (x_big - centers[None, :]) * scales[None, :]
    assert jnp.allclose(out_big, ref_big, atol=1e-6, rtol=1e-6), "mismatch (big)"

    print("KERNEL_OK")
</pallas_src>

<mosaic_0001>
module attributes {stable_mosaic.version = 11 : i64} {
  func.func @_input_scale_kernel(%arg0: i32, %arg1: memref<8x512xf32, #tpu.memory_space<vmem>>, %arg2: memref<1x512xf32, #tpu.memory_space<vmem>>, %arg3: memref<1x512xf32, #tpu.memory_space<vmem>>, %arg4: memref<8x512xf32, #tpu.memory_space<vmem>>) attributes {dimension_semantics = [#tpu.dimension_semantics<parallel>], iteration_bounds = array<i64: 1>, scalar_prefetch = 0 : i64, scratch_operands = 0 : i64, tpu.core_type = #tpu.core_type<tc>, window_params = [{transform_indices = @transform_0, window_bounds = array<i64: 8, 512>}, {pipeline_mode = #tpu.pipeline_mode<synchronous>, transform_indices = @transform_1, window_bounds = array<i64: 1, 512>}, {pipeline_mode = #tpu.pipeline_mode<synchronous>, transform_indices = @transform_2, window_bounds = array<i64: 1, 512>}, {transform_indices = @transform_3, window_bounds = array<i64: 8, 512>}]} {
    %c0 = arith.constant 0 : index
    %c0_0 = arith.constant 0 : index
    %0 = vector.load %arg1[%c0, %c0_0] : memref<8x512xf32, #tpu.memory_space<vmem>>, vector<8x512xf32>
    %c0_1 = arith.constant 0 : index
    %c0_2 = arith.constant 0 : index
    %1 = vector.load %arg2[%c0_1, %c0_2] : memref<1x512xf32, #tpu.memory_space<vmem>>, vector<1x512xf32>
    %2 = vector.broadcast %1 : vector<1x512xf32> to vector<8x512xf32>
    %3 = arith.subf %0, %2 : vector<8x512xf32>
    %c0_3 = arith.constant 0 : index
    %c0_4 = arith.constant 0 : index
    %4 = vector.load %arg3[%c0_3, %c0_4] : memref<1x512xf32, #tpu.memory_space<vmem>>, vector<1x512xf32>
    %5 = vector.broadcast %4 : vector<1x512xf32> to vector<8x512xf32>
    %6 = arith.mulf %3, %5 : vector<8x512xf32>
    %c0_5 = arith.constant 0 : index
    %c0_6 = arith.constant 0 : index
    %7 = vector.load %arg4[%c0_5, %c0_6] : memref<8x512xf32, #tpu.memory_space<vmem>>, vector<8x512xf32>
    tpu.vector_store %arg4[%c0_5, %c0_6], %6 {strides = array<i32>} : memref<8x512xf32, #tpu.memory_space<vmem>>, vector<8x512xf32>,
    return
  }
  func.func @transform_0(%arg0: i32) -> (i32, i32) {
    %c0_i32 = arith.constant 0 : i32
    %c0_i32_0 = arith.constant 0 : i32
    return %arg0, %c0_i32 : i32, i32
  }
  func.func @transform_1(%arg0: i32) -> (i32, i32) {
    %c0_i32 = arith.constant 0 : i32
    %c0_i32_0 = arith.constant 0 : i32
    %c0_i32_1 = arith.constant 0 : i32
    return %c0_i32, %c0_i32_0 : i32, i32
  }
  func.func @transform_2(%arg0: i32) -> (i32, i32) {
    %c0_i32 = arith.constant 0 : i32
    %c0_i32_0 = arith.constant 0 : i32
    %c0_i32_1 = arith.constant 0 : i32
    return %c0_i32, %c0_i32_0 : i32, i32
  }
  func.func @transform_3(%arg0: i32) -> (i32, i32) {
    %c0_i32 = arith.constant 0 : i32
    %c0_i32_0 = arith.constant 0 : i32
    return %arg0, %c0_i32 : i32, i32
  }
}

</mosaic_0001>

<llo_original>
// kernel: tpu_custom_call.1
$region0: #{tpu_custom_call.1}
  #allocation0 [shape = 'u32[]', space=smem, size = 0x4, offset = 0x4, fixed_abs, tag = 'smem constant byte address 0x4 - core index']
  #allocation1 [shape = 'u32[144,128]{1,0:T(1,128)}', space=vmem, size = 0x12000, scoped, tag = 'internal scratch']
  %s0 = inlined_call_operand.hbm [shape: f32[8,512], index: 0, kind: input, shape index: {}]
  %s1 = inlined_call_operand.hbm [shape: f32[1,512], index: 1, kind: input, shape index: {}]
  %s2 = inlined_call_operand.vmem [shape: f32[1,512], index: 2, kind: input, shape index: {}]
  %s3 = inlined_call_operand.hbm [shape: f32[8,512], index: 3, kind: output, shape index: {}]
  %s4 = sld [smem:[#allocation0]]
  $region30: #{tpu_custom_call.1} parent=0
    _
  %s6 = ssub.s32 1, %s4
  %s7 = scalar_select 0, %s6, %s4
  $region1: #{tpu_custom_call.1} parent=0
    #allocation2 [shape = 'u8[16384]{0}', space=vmem, size = 0x4000, scoped, tag = 'input window, operand 0, single buffered']
    #allocation3 [shape = 's32[1]{0}', space=sflag, size = 0x4, scoped, tag = 'scoped memory for tpu_custom_call.1']
    #allocation4 [shape = 's32[1]{0}', space=sflag, size = 0x4, scoped, tag = 'scoped memory for tpu_custom_call.1']
    #allocation5 [shape = 'u8[2048]{0}', space=vmem, size = 0x800, scoped, tag = 'input window, operand 1, single buffered']
    #allocation6 [shape = 's32[1]{0}', space=sflag, size = 0x4, scoped, tag = 'scoped memory for tpu_custom_call.1']
    #allocation7 [shape = 'u8[16384]{0}', space=vmem, size = 0x4000, scoped, tag = 'output window, operand 0, single buffered']
    %8 = vsyncpa [#allocation3], 0
    %9 = vsyncpa [#allocation6], 0
    %10 = vsyncpa [#allocation4], 0
    // Predicated region
    $region2: #{tpu_custom_call.1} parent=1 // pred_check
      _
    $region3: #{tpu_custom_call.1} parent=1 // pred_check_branch
      %12 = sbr.rel (0) target = $region5
    $region4: #{tpu_custom_call.1} parent=1 // pred_region
      %s14 = ssub.s32 512, 512
      %15 = vsyncadd [#allocation3], %s14
      %s17 = sshll.u32 [#allocation2], 4
      %s18 = int_to_ptr.vmem [resolvable:$true] %s17
      %20 = dma.hbm_to_vmem [thread:$0]  %s0, 512, %s18, [#allocation3]
    $region5: #{tpu_custom_call.1} parent=1 // pred_fallthru
      _
    // Predicated region
    $region6: #{tpu_custom_call.1} parent=1 // pred_check
      _
    $region7: #{tpu_custom_call.1} parent=1 // pred_check_branch
      %22 = sbr.rel (0) target = $region9
    $region8: #{tpu_custom_call.1} parent=1 // pred_region
      %s24 = ssub.s32 64, 64
      %25 = vsyncadd [#allocation6], %s24
      %s27 = sshll.u32 [#allocation5], 4
      %s28 = int_to_ptr.vmem [resolvable:$true] %s27
      %30 = dma.hbm_to_vmem [thread:$0]  %s1, 64, %s28, [#allocation6]
    $region9: #{tpu_custom_call.1} parent=1 // pred_fallthru
      _
    // Predicated region
    $region10: #{tpu_custom_call.1} parent=1 // pred_check
      _
    $region11: #{tpu_custom_call.1} parent=1 // pred_check_branch
      %32 = sbr.rel (0) target = $region13
    $region12: #{tpu_custom_call.1} parent=1 // pred_region
      _
    $region13: #{tpu_custom_call.1} parent=1 // pred_fallthru
      _
    // Predicated region
    $region14: #{tpu_custom_call.1} parent=1 // pred_check
      _
    $region15: #{tpu_custom_call.1} parent=1 // pred_check_branch
      %34 = sbr.rel (0) target = $region17
    $region16: #{tpu_custom_call.1} parent=1 // pred_region
      %35 = dma.done [#allocation3], 512
    $region17: #{tpu_custom_call.1} parent=1 // pred_fallthru
      _
    // Predicated region
    $region18: #{tpu_custom_call.1} parent=1 // pred_check
      _
    $region19: #{tpu_custom_call.1} parent=1 // pred_check_branch
      %37 = sbr.rel (0) target = $region21
    $region20: #{tpu_custom_call.1} parent=1 // pred_region
      %38 = dma.done [#allocation6], 64
    $region21: #{tpu_custom_call.1} parent=1 // pred_fallthru
      _
    %v39 = vld [vmem:[#allocation2] sm:$0xff]
    %v40 = vld [vmem:[#allocation2 + $0x8] sm:$0xff]
    %v41 = vld [vmem:[#allocation2 + $0x10] sm:$0xff]
    %v42 = vld [vmem:[#allocation2 + $0x18] sm:$0xff]
    %v43 = vld [vmem:[#allocation5] sm:$0xf]
    %v45 = vlaneseq
    %v46 = vshrl.u32 %v45, 7
    %v47 = vsub.s32 0, %v46
    %v48 = vrot.slane %v43, %v47
    %v49 = vlaneseq
    %v50 = vshrl.u32 %v49, 7
    %v51 = vsub.s32 1, %v50
    %v52 = vrot.slane %v43, %v51
    %v53 = vlaneseq
    %v54 = vshrl.u32 %v53, 7
    %v55 = vsub.s32 2, %v54
    %v56 = vrot.slane %v43, %v55
    %v57 = vlaneseq
    %v58 = vshrl.u32 %v57, 7
    %v59 = vsub.s32 3, %v58
    %v60 = vrot.slane %v43, %v59
    %v65 = vsub.f32 %v39, %v48
    %v66 = vsub.f32 %v40, %v52
    %v67 = vsub.f32 %v41, %v56
    %v68 = vsub.f32 %v42, %v60
    %v69 = vld [vmem:[%s2] sm:$0xf]
    %v71 = vlaneseq
    %v72 = vshrl.u32 %v71, 7
    %v73 = vsub.s32 0, %v72
    %v74 = vrot.slane %v69, %v73
    %v75 = vlaneseq
    %v76 = vshrl.u32 %v75, 7
    %v77 = vsub.s32 1, %v76
    %v78 = vrot.slane %v69, %v77
    %v79 = vlaneseq
    %v80 = vshrl.u32 %v79, 7
    %v81 = vsub.s32 2, %v80
    %v82 = vrot.slane %v69, %v81
    %v83 = vlaneseq
    %v84 = vshrl.u32 %v83, 7
    %v85 = vsub.s32 3, %v84
    %v86 = vrot.slane %v69, %v85
    %v91 = vmul.f32 %v65, %v74
    %v92 = vmul.f32 %v66, %v78
    %v93 = vmul.f32 %v67, %v82
    %v94 = vmul.f32 %v68, %v86
    %95 = vst [vmem:[#allocation7] sm:$0xff] %v91
    %96 = vst [vmem:[#allocation7 + $0x8] sm:$0xff] %v92
    %97 = vst [vmem:[#allocation7 + $0x10] sm:$0xff] %v93
    %98 = vst [vmem:[#allocation7 + $0x18] sm:$0xff] %v94
    // Predicated region
    $region22: #{tpu_custom_call.1} parent=1 // pred_check
      _
    $region23: #{tpu_custom_call.1} parent=1 // pred_check_branch
      %100 = sbr.rel (0) target = $region25
    $region24: #{tpu_custom_call.1} parent=1 // pred_region
      %s102 = ssub.s32 512, 512
      %103 = vsyncadd [#allocation4], %s102
      %s105 = sshll.u32 [#allocation7], 4
      %s106 = int_to_ptr.vmem [resolvable:$true] %s105
      %108 = dma.vmem_to_hbm [thread:$0]  %s106, 512, %s3, [#allocation4]
    $region25: #{tpu_custom_call.1} parent=1 // pred_fallthru
      _
    // Predicated region
    $region26: #{tpu_custom_call.1} parent=1 // pred_check
      _
    $region27: #{tpu_custom_call.1} parent=1 // pred_check_branch
      %110 = sbr.rel (0) target = $region29
    $region28: #{tpu_custom_call.1} parent=1 // pred_region
      %111 = dma.done [#allocation4], 512
    $region29: #{tpu_custom_call.1} parent=1 // pred_fallthru
      _
    %112 = vsyncpa [#allocation3], 1
    %113 = vsyncpa [#allocation6], 1
    %114 = vsyncpa [#allocation4], 1

</llo_original>
